<compile_context>
chip_gen: v5e
topology: v5e:2x2
jax: 0.10.0
libtpu: 0.0.40
codegen_flags: <defaults>
</compile_context>

<pallas_src>
import math

import jax
import jax.numpy as jnp
import numpy as np
from jax import lax
from jax.experimental import pallas as pl
from jax.experimental.pallas import tpu as pltpu


def _round_up(x, m):
    return (x + m - 1) // m * m


def _choose_tn(hp, block_n):
    """Largest multiple of 128 that divides hp and is <= max(block_n, 128)."""
    q = hp // 128
    best = 1
    for d in range(1, q + 1):
        if q % d == 0 and 128 * d <= max(block_n, 128):
            best = d
    return 128 * best


# --------------------------------------------------------------------------
# Fused kernel: sinusoidal timestep embedding -> Linear -> SiLU -> Linear
# Grid: (batch tiles ["parallel"], output-column tiles ["arbitrary"]).
# --------------------------------------------------------------------------
def _timestep_embed_kernel(t_ref, freq_ref, phase_ref, w1_ref, b1_ref, w2_ref, b2_ref,
                           o_ref, h_ref):
    wdtype = w1_ref.dtype
    # lhs(m,k) @ rhs(k,n): MXU-native feed, weights are pre-transposed to (in, out).
    dn = (((1,), (0,)), ((), ()))

    @pl.when(pl.program_id(1) == 0)
    def _():
        t = t_ref[...].astype(jnp.float32)                      # (bm, 1)
        # Timesteps(flip_sin_to_cos=True, downscale_freq_shift=0):
        #   emb = [cos(t*f_j), sin(t*f_j)]  ==  cos(t*f_cat + phase), phase=[0,-pi/2]
        ang = t * freq_ref[...] + phase_ref[...]                # (bm, F) f32
        emb = jnp.cos(ang).astype(wdtype)                       # == .to(dtype=wdtype)

        h = lax.dot_general(emb, w1_ref[...], dn,
                            preferred_element_type=jnp.float32)  # (bm, Hp) f32
        h = h + b1_ref[...].astype(jnp.float32)
        # SiLU: h * sigmoid(h); exp + approx reciprocal both run on the EUP slot.
        h = h * pl.reciprocal(1.0 + jnp.exp(-h), approx=True)
        h_ref[...] = h.astype(wdtype)                           # persists across N axis

    y = lax.dot_general(h_ref[...], w2_ref[...], dn,
                        preferred_element_type=jnp.float32)     # (bm, tn) f32
    y = y + b2_ref[...].astype(jnp.float32)
    o_ref[...] = y.astype(o_ref.dtype)


# --------------------------------------------------------------------------
# One-time parameter repack (call once, outside the per-step hot path).
# --------------------------------------------------------------------------
def prepare_params(params, *, max_period=10000.0):
    """PyTorch-layout (out, in) weights -> kernel layout.

    w1 (H, F) -> w1t (F, Hp)  k-major, output dim padded to a multiple of 128 lanes
    w2 (H, H) -> w2t (Hp, Hp) k-major, padded
    biases    -> (1, Hp) rows; plus precomputed frequency / phase rows.
    """
    w1, b1, w2, b2 = params["w1"], params["b1"], params["w2"], params["b2"]
    wdtype = w1.dtype
    H, F = w1.shape
    half = F // 2
    Hp = _round_up(H, 128)

    j = jnp.arange(half, dtype=jnp.float32)
    base = jnp.exp(-math.log(max_period) * j / half)
    freq = jnp.concatenate([base, base]).reshape(1, F)
    phase = jnp.concatenate([jnp.zeros((half,), jnp.float32),
                             jnp.full((half,), -0.5 * math.pi, jnp.float32)]).reshape(1, F)

    pad_h = Hp - H
    return {
        "freq": freq,                                                        # (1, F) f32
        "phase": phase,                                                      # (1, F) f32
        "w1t": jnp.pad(w1.T.astype(wdtype), ((0, 0), (0, pad_h))),           # (F, Hp)
        "b1": jnp.pad(b1.reshape(1, H).astype(wdtype), ((0, 0), (0, pad_h))),  # (1, Hp)
        "w2t": jnp.pad(w2.T.astype(wdtype), ((0, pad_h), (0, pad_h))),       # (Hp, Hp)
        "b2": jnp.pad(b2.reshape(1, H).astype(wdtype), ((0, 0), (0, pad_h))),  # (1, Hp)
    }


def timestep_embed(t, prepared, *, hidden, block_b=256, block_n=1024):
    """TimestepEmbed forward.  t: (B,) float timesteps -> (B, hidden) in wdtype."""
    w1t, b1 = prepared["w1t"], prepared["b1"]
    w2t, b2 = prepared["w2t"], prepared["b2"]
    freq, phase = prepared["freq"], prepared["phase"]
    wdtype = w1t.dtype
    F, Hp = w1t.shape
    B = t.shape[0]

    # Batch tiling: 8-sublane aligned; >= 2 tiles as soon as the padded batch allows it
    # so the "parallel" axis can be sharded across TensorCores (v7x megacore).
    Bp8 = _round_up(B, 8)
    bm = Bp8 if Bp8 < 16 else min(block_b, _round_up(Bp8 // 2, 8))
    Bp = _round_up(Bp8, bm)
    nb = Bp // bm

    # Output-column tiling (keeps a (Hp, tn) w2 block + intermediates inside VMEM).
    tn = _choose_tn(Hp, block_n)
    nn = Hp // tn

    t2 = t.astype(jnp.float32).reshape(B, 1)
    if Bp != B:
        t2 = jnp.pad(t2, ((0, Bp - B), (0, 0)))

    single = pl.Buffered(1)

    def spec(shape, index_map, mode=None):
        if mode is None:
            return pl.BlockSpec(shape, index_map)
        return pl.BlockSpec(shape, index_map, pipeline_mode=mode)

    # w2/b2 are grid-invariant only when there is a single N tile.
    w2_mode = single if nn == 1 else None

    it = jnp.dtype(wdtype).itemsize
    w2_bufs = 1 if nn == 1 else 2
    vmem_est = (
        2 * bm * 4                           # t (double buffered)
        + 2 * F * 4                          # freq + phase (single buffered)
        + (F * Hp + Hp) * it                 # w1t + b1 (single buffered)
        + w2_bufs * (Hp * tn + tn) * it      # w2t + b2
        + 2 * bm * tn * it                   # output (double buffered)
        + bm * Hp * it                       # h scratch
        + 4 * bm * max(F, Hp) * 4            # f32 elementwise temporaries headroom
    )
    compiler_params = pltpu.CompilerParams(
        dimension_semantics=("parallel", "arbitrary"),
        vmem_limit_bytes=int(min(128 << 20, max(32 << 20, int(1.5 * vmem_est)))),
    )
    cost = pl.CostEstimate(
        flops=2 * Bp * (F * Hp + Hp * Hp),
        transcendentals=Bp * (F + 2 * Hp),
        bytes_accessed=(Bp * 4 + 2 * F * 4
                        + (F * Hp + Hp + Hp * Hp + Hp) * it
                        + Bp * Hp * it),
    )

    out = pl.pallas_call(
        _timestep_embed_kernel,
        out_shape=jax.ShapeDtypeStruct((Bp, Hp), wdtype),
        grid=(nb, nn),
        in_specs=[
            spec((bm, 1), lambda i, j: (i, 0)),                    # t
            spec((1, F), lambda i, j: (0, 0), single),             # freq
            spec((1, F), lambda i, j: (0, 0), single),             # phase
            spec((F, Hp), lambda i, j: (0, 0), single),            # w1t
            spec((1, Hp), lambda i, j: (0, 0), single),            # b1
            spec((Hp, tn), lambda i, j: (0, j), w2_mode),          # w2t
            spec((1, tn), lambda i, j: (0, j), w2_mode),           # b2
        ],
        out_specs=pl.BlockSpec((bm, tn), lambda i, j: (i, j)),     # lane-dense output
        scratch_shapes=[pltpu.VMEM((bm, Hp), wdtype)],             # Linear1+SiLU result
        compiler_params=compiler_params,
        cost_estimate=cost,
    )(t2, freq, phase, w1t, b1, w2t, b2)

    if Bp != B or Hp != hidden:
        out = out[:B, :hidden]
    return out


# --------------------------------------------------------------------------
# Pure-JAX reference (literal transcription of the PyTorch module)
# --------------------------------------------------------------------------
def timestep_embed_ref(t, params, *, max_period=10000.0):
    w1, b1, w2, b2 = params["w1"], params["b1"], params["w2"], params["b2"]
    wdtype = w1.dtype
    H, F = w1.shape
    half = F // 2
    j = jnp.arange(half, dtype=jnp.float32)
    freqs = jnp.exp(-math.log(max_period) * j / half)
    ang = t.astype(jnp.float32)[:, None] * freqs[None, :]
    emb = jnp.concatenate([jnp.sin(ang), jnp.cos(ang)], axis=-1)
    emb = jnp.concatenate([emb[:, half:], emb[:, :half]], axis=-1)   # flip_sin_to_cos
    emb = emb.astype(wdtype)
    h = jnp.dot(emb, w1.T, preferred_element_type=jnp.float32) + b1.astype(jnp.float32)
    h = h * jax.nn.sigmoid(h)
    y = jnp.dot(h.astype(wdtype), w2.T,
                preferred_element_type=jnp.float32) + b2.astype(jnp.float32)
    return y.astype(wdtype)


# --------------------------------------------------------------------------
def init_params(key, hidden_size=128, freq_dim=256, dtype=jnp.float32):
    k1, k2, k3, k4 = jax.random.split(key, 4)
    s1 = 1.0 / math.sqrt(freq_dim)
    s2 = 1.0 / math.sqrt(hidden_size)
    return {
        "w1": jax.random.uniform(k1, (hidden_size, freq_dim), jnp.float32, -s1, s1).astype(dtype),
        "b1": jax.random.uniform(k2, (hidden_size,), jnp.float32, -s1, s1).astype(dtype),
        "w2": jax.random.uniform(k3, (hidden_size, hidden_size), jnp.float32, -s2, s2).astype(dtype),
        "b2": jax.random.uniform(k4, (hidden_size,), jnp.float32, -s2, s2).astype(dtype),
    }


if __name__ == "__main__":
    root = jax.random.PRNGKey(0)
    fwd = jax.jit(timestep_embed, static_argnames=("hidden", "block_b", "block_n"))

    def run_case(idx, B, hidden, freq_dim, dtype, block_n, tol):
        kp, kt = jax.random.split(jax.random.fold_in(root, idx))
        params = init_params(kp, hidden_size=hidden, freq_dim=freq_dim, dtype=dtype)
        t = jax.random.uniform(kt, (B,), jnp.float32, 0.0, 1000.0)   # diffusion timesteps
        prepared = prepare_params(params)                            # one-time repack
        out = fwd(t, prepared, hidden=hidden, block_b=256, block_n=block_n)
        jax.block_until_ready(out)
        assert out.shape == (B, hidden) and out.dtype == dtype
        ref = timestep_embed_ref(t, params)
        np.testing.assert_allclose(np.asarray(out, np.float32), np.asarray(ref, np.float32),
                                   rtol=tol, atol=tol)

    # 1) Module defaults at small shapes: H=128, F=256, B=2, f32, single grid step.
    run_case(0, B=2, hidden=128, freq_dim=256, dtype=jnp.float32, block_n=1024, tol=3e-3)
    # 2) Non-multiple-of-128 hidden + unaligned batch + forced N tiling (2 column tiles).
    run_case(1, B=5, hidden=192, freq_dim=256, dtype=jnp.float32, block_n=128, tol=3e-3)
    # 3) bf16 weights (production wdtype) with 2 batch tiles on the "parallel" axis.
    run_case(2, B=32, hidden=256, freq_dim=256, dtype=jnp.bfloat16, block_n=1024, tol=2e-2)

    print("KERNEL_OK")
</pallas_src>

<mosaic_0001>
module attributes {stable_mosaic.version = 11 : i64} {
  func.func @_timestep_embed_kernel(%arg0: i32, %arg1: i32, %arg2: memref<8x1xf32, #tpu.memory_space<vmem>>, %arg3: memref<1x256xf32, #tpu.memory_space<vmem>>, %arg4: memref<1x256xf32, #tpu.memory_space<vmem>>, %arg5: memref<256x128xf32, #tpu.memory_space<vmem>>, %arg6: memref<1x128xf32, #tpu.memory_space<vmem>>, %arg7: memref<128x128xf32, #tpu.memory_space<vmem>>, %arg8: memref<1x128xf32, #tpu.memory_space<vmem>>, %arg9: memref<8x128xf32, #tpu.memory_space<vmem>>, %arg10: memref<8x128xf32, #tpu.memory_space<vmem>>) attributes {dimension_semantics = [#tpu.dimension_semantics<parallel>, #tpu.dimension_semantics<arbitrary>], iteration_bounds = array<i64: 1, 1>, scalar_prefetch = 0 : i64, scratch_operands = 1 : i64, tpu.core_type = #tpu.core_type<tc>, window_params = [{transform_indices = @transform_0, window_bounds = array<i64: 8, 1>}, {pipeline_mode = #tpu.pipeline_mode<synchronous>, transform_indices = @transform_1, window_bounds = array<i64: 1, 256>}, {pipeline_mode = #tpu.pipeline_mode<synchronous>, transform_indices = @transform_2, window_bounds = array<i64: 1, 256>}, {pipeline_mode = #tpu.pipeline_mode<synchronous>, transform_indices = @transform_3, window_bounds = array<i64: 256, 128>}, {pipeline_mode = #tpu.pipeline_mode<synchronous>, transform_indices = @transform_4, window_bounds = array<i64: 1, 128>}, {pipeline_mode = #tpu.pipeline_mode<synchronous>, transform_indices = @transform_5, window_bounds = array<i64: 128, 128>}, {pipeline_mode = #tpu.pipeline_mode<synchronous>, transform_indices = @transform_6, window_bounds = array<i64: 1, 128>}, {transform_indices = @transform_7, window_bounds = array<i64: 8, 128>}]} {
    %c0_i32 = arith.constant 0 : i32
    %0 = arith.cmpi eq, %arg1, %c0_i32 : i32
    %1 = arith.extui %0 : i1 to i32
    %c0_i32_0 = arith.constant 0 : i32
    %2 = arith.cmpi ne, %1, %c0_i32_0 : i32
    scf.if %2 {
      %c0_8 = arith.constant 0 : index
      %c0_9 = arith.constant 0 : index
      %10 = vector.load %arg2[%c0_8, %c0_9] : memref<8x1xf32, #tpu.memory_space<vmem>>, vector<8x1xf32>
      %c0_10 = arith.constant 0 : index
      %c0_11 = arith.constant 0 : index
      %11 = vector.load %arg3[%c0_10, %c0_11] : memref<1x256xf32, #tpu.memory_space<vmem>>, vector<1x256xf32>
      %12 = vector.broadcast %10 : vector<8x1xf32> to vector<8x256xf32>
      %13 = vector.broadcast %11 : vector<1x256xf32> to vector<8x256xf32>
      %14 = arith.mulf %12, %13 : vector<8x256xf32>
      %c0_12 = arith.constant 0 : index
      %c0_13 = arith.constant 0 : index
      %15 = vector.load %arg4[%c0_12, %c0_13] : memref<1x256xf32, #tpu.memory_space<vmem>>, vector<1x256xf32>
      %16 = vector.broadcast %15 : vector<1x256xf32> to vector<8x256xf32>
      %17 = arith.addf %14, %16 : vector<8x256xf32>
      %18 = math.cos %17 : vector<8x256xf32>
      %c0_14 = arith.constant 0 : index
      %c0_15 = arith.constant 0 : index
      %19 = vector.load %arg5[%c0_14, %c0_15] : memref<256x128xf32, #tpu.memory_space<vmem>>, vector<256x128xf32>
      %cst_16 = arith.constant dense<0.000000e+00> : vector<8x128xf32>
      %20 = tpu.matmul %18, %19, %cst_16 {dimension_numbers = #tpu.dot_dimension_numbers<[1], [0], [0], [1], [0, 0, 1, 1], [], []>} : vector<8x256xf32>, vector<256x128xf32>, vector<8x128xf32> -> vector<8x128xf32>
      %c0_17 = arith.constant 0 : index
      %c0_18 = arith.constant 0 : index
      %21 = vector.load %arg6[%c0_17, %c0_18] : memref<1x128xf32, #tpu.memory_space<vmem>>, vector<1x128xf32>
      %22 = vector.broadcast %21 : vector<1x128xf32> to vector<8x128xf32>
      %23 = arith.addf %20, %22 : vector<8x128xf32>
      %cst_19 = arith.constant 0.000000e+00 : f32
      %24 = vector.broadcast %cst_19 : f32 to vector<8x128xf32>
      %25 = arith.subf %24, %23 : vector<8x128xf32>
      %26 = math.exp %25 : vector<8x128xf32>
      %cst_20 = arith.constant 1.000000e+00 : f32
      %27 = vector.broadcast %cst_20 : f32 to vector<8x128xf32>
      %28 = arith.addf %27, %26 : vector<8x128xf32>
      %29 = tpu.reciprocal %28 {approx = true} : vector<8x128xf32> -> vector<8x128xf32>
      %30 = arith.mulf %23, %29 : vector<8x128xf32>
      %c0_21 = arith.constant 0 : index
      %c0_22 = arith.constant 0 : index
      %31 = vector.load %arg10[%c0_21, %c0_22] : memref<8x128xf32, #tpu.memory_space<vmem>>, vector<8x128xf32>
      tpu.vector_store %arg10[%c0_21, %c0_22], %30 {strides = array<i32>} : memref<8x128xf32, #tpu.memory_space<vmem>>, vector<8x128xf32>,
    } else {
    }
    %c0 = arith.constant 0 : index
    %c0_1 = arith.constant 0 : index
    %3 = vector.load %arg10[%c0, %c0_1] : memref<8x128xf32, #tpu.memory_space<vmem>>, vector<8x128xf32>
    %c0_2 = arith.constant 0 : index
    %c0_3 = arith.constant 0 : index
    %4 = vector.load %arg7[%c0_2, %c0_3] : memref<128x128xf32, #tpu.memory_space<vmem>>, vector<128x128xf32>
    %cst = arith.constant dense<0.000000e+00> : vector<8x128xf32>
    %5 = tpu.matmul %3, %4, %cst {dimension_numbers = #tpu.dot_dimension_numbers<[1], [0], [0], [1], [0, 0, 1, 1], [], []>} : vector<8x128xf32>, vector<128x128xf32>, vector<8x128xf32> -> vector<8x128xf32>
    %c0_4 = arith.constant 0 : index
    %c0_5 = arith.constant 0 : index
    %6 = vector.load %arg8[%c0_4, %c0_5] : memref<1x128xf32, #tpu.memory_space<vmem>>, vector<1x128xf32>
    %7 = vector.broadcast %6 : vector<1x128xf32> to vector<8x128xf32>
    %8 = arith.addf %5, %7 : vector<8x128xf32>
    %c0_6 = arith.constant 0 : index
    %c0_7 = arith.constant 0 : index
    %9 = vector.load %arg9[%c0_6, %c0_7] : memref<8x128xf32, #tpu.memory_space<vmem>>, vector<8x128xf32>
    tpu.vector_store %arg9[%c0_6, %c0_7], %8 {strides = array<i32>} : memref<8x128xf32, #tpu.memory_space<vmem>>, vector<8x128xf32>,
    return
  }
  func.func @transform_0(%arg0: i32, %arg1: i32) -> (i32, i32) {
    %c0_i32 = arith.constant 0 : i32
    %c0_i32_0 = arith.constant 0 : i32
    return %arg0, %c0_i32 : i32, i32
  }
  func.func @transform_1(%arg0: i32, %arg1: i32) -> (i32, i32) {
    %c0_i32 = arith.constant 0 : i32
    %c0_i32_0 = arith.constant 0 : i32
    %c0_i32_1 = arith.constant 0 : i32
    return %c0_i32, %c0_i32_0 : i32, i32
  }
  func.func @transform_2(%arg0: i32, %arg1: i32) -> (i32, i32) {
    %c0_i32 = arith.constant 0 : i32
    %c0_i32_0 = arith.constant 0 : i32
    %c0_i32_1 = arith.constant 0 : i32
    return %c0_i32, %c0_i32_0 : i32, i32
  }
  func.func @transform_3(%arg0: i32, %arg1: i32) -> (i32, i32) {
    %c0_i32 = arith.constant 0 : i32
    %c0_i32_0 = arith.constant 0 : i32
    %c0_i32_1 = arith.constant 0 : i32
    return %c0_i32, %c0_i32_0 : i32, i32
  }
  func.func @transform_4(%arg0: i32, %arg1: i32) -> (i32, i32) {
    %c0_i32 = arith.constant 0 : i32
    %c0_i32_0 = arith.constant 0 : i32
    %c0_i32_1 = arith.constant 0 : i32
    return %c0_i32, %c0_i32_0 : i32, i32
  }
  func.func @transform_5(%arg0: i32, %arg1: i32) -> (i32, i32) {
    %c0_i32 = arith.constant 0 : i32
    %c0_i32_0 = arith.constant 0 : i32
    return %c0_i32, %arg1 : i32, i32
  }
  func.func @transform_6(%arg0: i32, %arg1: i32) -> (i32, i32) {
    %c0_i32 = arith.constant 0 : i32
    %c0_i32_0 = arith.constant 0 : i32
    return %c0_i32, %arg1 : i32, i32
  }
  func.func @transform_7(%arg0: i32, %arg1: i32) -> (i32, i32) {
    %c0_i32 = arith.constant 0 : i32
    return %arg0, %arg1 : i32, i32
  }
}

</mosaic_0001>

<llo_original>
// kernel: timestep_embed.1
$region0: #{timestep_embed.1}
  #allocation0 [shape = 'u32[]', space=smem, size = 0x4, offset = 0x4, fixed_abs, tag = 'smem constant byte address 0x4 - core index']
  #allocation1 [shape = 'u32[72,128]{1,0:T(1,128)}', space=vmem, size = 0x9000, scoped, tag = 'internal scratch']
  #allocation2 [shape = 'f32[8,128]{1,0:T(8,128)}', space=vmem, size = 0x1000, scoped, tag = 'scratch operand']
  %s0 = inlined_call_operand.vmem [shape: f32[8,1], index: 0, kind: input, shape index: {}]
  %s1 = inlined_call_operand.vmem [shape: f32[1,256], index: 1, kind: input, shape index: {}]
  %s2 = inlined_call_operand.vmem [shape: f32[1,256], index: 2, kind: input, shape index: {}]
  %s3 = inlined_call_operand.hbm [shape: f32[256,128], index: 3, kind: input, shape index: {}]
  %s4 = inlined_call_operand.vmem [shape: f32[1,128], index: 4, kind: input, shape index: {}]
  %s5 = inlined_call_operand.hbm [shape: f32[128,128], index: 5, kind: input, shape index: {}]
  %s6 = inlined_call_operand.vmem [shape: f32[1,128], index: 6, kind: input, shape index: {}]
  %s7 = inlined_call_operand.vmem [shape: f32[8,128], index: 7, kind: output, shape index: {}]
  %s8 = sld [smem:[#allocation0]]
  $region50: #{timestep_embed.1} parent=0
    _
  %s10 = ssub.s32 1, %s8
  %s11 = scalar_select 0, %s10, %s8
  $region1: #{timestep_embed.1} parent=0
    #allocation3 [shape = 'u8[131072]{0}', space=vmem, size = 0x20000, scoped, tag = 'input window, operand 3, single buffered']
    #allocation4 [shape = 's32[1]{0}', space=sflag, size = 0x4, scoped, tag = 'scoped memory for timestep_embed.1']
    #allocation5 [shape = 'u8[65536]{0}', space=vmem, size = 0x10000, scoped, tag = 'input window, operand 5, single buffered']
    #allocation6 [shape = 's32[1]{0}', space=sflag, size = 0x4, scoped, tag = 'scoped memory for timestep_embed.1']
    %12 = vsyncpa [#allocation4], 0
    %13 = vsyncpa [#allocation6], 0
    // Predicated region
    $region2: #{timestep_embed.1} parent=1 // pred_check
      _
    $region3: #{timestep_embed.1} parent=1 // pred_check_branch
      %15 = sbr.rel (0) target = $region5
    $region4: #{timestep_embed.1} parent=1 // pred_region
      _
    $region5: #{timestep_embed.1} parent=1 // pred_fallthru
      _
    // Predicated region
    $region6: #{timestep_embed.1} parent=1 // pred_check
      _
    $region7: #{timestep_embed.1} parent=1 // pred_check_branch
      %17 = sbr.rel (0) target = $region9
    $region8: #{timestep_embed.1} parent=1 // pred_region
      _
    $region9: #{timestep_embed.1} parent=1 // pred_fallthru
      _
    // Predicated region
    $region10: #{timestep_embed.1} parent=1 // pred_check
      _
    $region11: #{timestep_embed.1} parent=1 // pred_check_branch
      %19 = sbr.rel (0) target = $region13
    $region12: #{timestep_embed.1} parent=1 // pred_region
      _
    $region13: #{timestep_embed.1} parent=1 // pred_fallthru
      _
    // Predicated region
    $region14: #{timestep_embed.1} parent=1 // pred_check
      _
    $region15: #{timestep_embed.1} parent=1 // pred_check_branch
      %21 = sbr.rel (0) target = $region17
    $region16: #{timestep_embed.1} parent=1 // pred_region
      %23 = vsyncadd [#allocation4], 0
      %s24 = sshll.u32 %s3, 4
      %s25 = int_to_ptr.hbm [resolvable:$true] %s24
      %s26 = sshll.u32 [#allocation3], 4
      %s27 = int_to_ptr.vmem [resolvable:$true] %s26
      %32 = dma.hbm_to_vmem [thread:$0]  %s25, 4096, %s27, [#allocation4], 128, 128, 8
    $region17: #{timestep_embed.1} parent=1 // pred_fallthru
      _
    // Predicated region
    $region18: #{timestep_embed.1} parent=1 // pred_check
      _
    $region19: #{timestep_embed.1} parent=1 // pred_check_branch
      %34 = sbr.rel (0) target = $region21
    $region20: #{timestep_embed.1} parent=1 // pred_region
      _
    $region21: #{timestep_embed.1} parent=1 // pred_fallthru
      _
    // Predicated region
    $region22: #{timestep_embed.1} parent=1 // pred_check
      _
    $region23: #{timestep_embed.1} parent=1 // pred_check_branch
      %36 = sbr.rel (0) target = $region25
    $region24: #{timestep_embed.1} parent=1 // pred_region
      %38 = vsyncadd [#allocation6], 0
      %s39 = sshll.u32 %s5, 4
      %s40 = int_to_ptr.hbm [resolvable:$true] %s39
      %s41 = sshll.u32 [#allocation5], 4
      %s42 = int_to_ptr.vmem [resolvable:$true] %s41
      %47 = dma.hbm_to_vmem [thread:$0]  %s40, 2048, %s42, [#allocation6], 128, 128, 8
    $region25: #{timestep_embed.1} parent=1 // pred_fallthru
      _
    // Predicated region
    $region26: #{timestep_embed.1} parent=1 // pred_check
      _
    $region27: #{timestep_embed.1} parent=1 // pred_check_branch
      %49 = sbr.rel (0) target = $region29
    $region28: #{timestep_embed.1} parent=1 // pred_region
      _
    $region29: #{timestep_embed.1} parent=1 // pred_fallthru
      _
    // Predicated region
    $region30: #{timestep_embed.1} parent=1 // pred_check
      _
    $region31: #{timestep_embed.1} parent=1 // pred_check_branch
      %51 = sbr.rel (0) target = $region33
    $region32: #{timestep_embed.1} parent=1 // pred_region
      %53 = dma.done [#allocation4], 4096
    $region33: #{timestep_embed.1} parent=1 // pred_fallthru
      _
    // Predicated region
    $region34: #{timestep_embed.1} parent=1 // pred_check
      _
    $region35: #{timestep_embed.1} parent=1 // pred_check_branch
      %55 = sbr.rel (0) target = $region37
    $region36: #{timestep_embed.1} parent=1 // pred_region
      %57 = dma.done [#allocation6], 2048
    $region37: #{timestep_embed.1} parent=1 // pred_fallthru
      _
    %p58 = scmp.eq.s32.totalorder 0, 0
    // Predicated region
    $region38: #{timestep_embed.1} parent=1 // pred_check
      %p59 = pneg %p58
    $region39: #{timestep_embed.1} parent=1 // pred_check_branch
      %61 = sbr.rel (%p59) target = $region41
    $region40: #{timestep_embed.1} parent=1 // pred_region
      %v62 = vld [vmem:[%s0] sm:$0xff]
      %v63 = vld [vmem:[%s1] sm:$0x3]
      %65 = vset.pattern.permute.xlu0 0
      %66 = vperm.xlu0 %65, %v62
      %v67 = vpop.permute.xlu0 %66
      %v70 = vperm.slane %v63, 0
      %v71 = vperm.slane %v63, 1
      %v74 = vmul.f32 %v67, %v70
      %v75 = vmul.f32 %v67, %v71
      %v76 = vld [vmem:[%s2] sm:$0x3]
      %v78 = vperm.slane %v76, 0
      %v79 = vperm.slane %v76, 1
      %v82 = vadd.f32 %v74, %v78
      %v83 = vadd.f32 %v75, %v79
      %v84 = vand.u32 2147483647, %v82
      %vm85 = vcmp.le.f32.partialorder %v84, 0.7853982
      %vm86 = vcmp.lt.s32.totalorder %v82, 0
      %v87 = vand.u32 %v82, 2139095040
      %v88 = vshrl.u32 %v87, 23
      %v89 = vsub.s32 %v88, 127
      %v90 = vand.u32 2147483647, %v82
      %v91 = vand.u32 %v90, 8388607
      %v92 = vor.u32 %v91, 8388608
      %v93 = vsub.s32 0, %v92
      %v94 = vadd.s32 %v89, 1
      %vm95 = vcmp.gt.s32.totalorder %v94, 0
      %v96 = vsel %vm95, %v94, 0
      %v97 = vshrl.u32 %v96, 5
      %v98 = vand.u32 %v96, 31
      %v99 = vsub.s32 32, %v98
      %v100 = vshrl.u32 683565275, %v99
      %v101 = vshll.u32 683565275, %v98
      %v102 = vshrl.u32 2475754826, %v99
      %v103 = vor.u32 %v101, %v102
      %v104 = vshll.u32 2475754826, %v98
      %v105 = vshrl.u32 2131351028, %v99
      %v106 = vor.u32 %v104, %v105
      %v107 = vshll.u32 2131351028, %v98
      %v108 = vshrl.u32 2102212464, %v99
      %v109 = vor.u32 %v107, %v108
      %v110 = vshll.u32 2102212464, %v98
      %v111 = vshrl.u32 920167782, %v99
      %v112 = vor.u32 %v110, %v111
      %v113 = vshll.u32 920167782, %v98
      %v114 = vshrl.u32 1326507024, %v99
      %v115 = vor.u32 %v113, %v114
      %vm116 = vcmp.lt.s32.totalorder %v97, 1
      %vm117 = vcmp.lt.s32.totalorder %v97, 2
      %vm118 = vcmp.lt.s32.totalorder %v97, 3
      %vm119 = vcmp.lt.s32.totalorder %v97, 4
      %v120 = vsel %vm116, %v100, %v103
      %v121 = vsel %vm119, %v109, 2102212464
      %v122 = vsel %vm118, %v106, %v121
      %v123 = vsel %vm117, %v120, %v122
      %v124 = vsel %vm116, %v103, %v106
      %v125 = vsel %vm119, %v112, 920167782
      %v126 = vsel %vm118, %v109, %v125
      %v127 = vsel %vm117, %v124, %v126
      %v128 = vsel %vm116, %v106, %v109
      %v129 = vsel %vm119, %v115, 1326507024
      %v130 = vsel %vm118, %v112, %v129
      %v131 = vsel %vm117, %v128, %v130
      %v132 = vshll.u32 %v92, 8
      %v133 = vand.u32 %v132, 65535
      %v134 = vshrl.u32 %v132, 16
      %v135 = vand.u32 %v131, 65535
      %v136 = vshrl.u32 %v131, 16
      %v137 = vmul.u32 %v133, %v135
      %v138 = vmul.u32 %v133, %v136
      %v139 = vmul.u32 %v134, %v135
      %v140 = vmul.u32 %v134, %v136
      %v141 = vshll.u32 %v138, 16
      %v142 = vshrl.u32 %v138, 16
      %v143 = vshll.u32 %v139, 16
      %v144 = vshrl.u32 %v139, 16
      %vm145 = vc.u32 %v137, %v141
      %v146 = vsel %vm145, 1, 0
      %v147 = vadd.s32 %v137, %v141
      %v148 = vadd.s32 %v140, %v146
      %vm149 = vc.u32 %v147, %v143
      %v150 = vsel %vm149, 1, 0
      %v151 = vadd.s32 %v147, %v143
      %v152 = vadd.s32 %v148, %v150
      %v153 = vadd.s32 %v152, %v142
      %v154 = vadd.s32 %v153, %v144
      %v155 = vand.u32 %v132, 65535
      %v156 = vshrl.u32 %v132, 16
      %v157 = vand.u32 %v127, 65535
      %v158 = vshrl.u32 %v127, 16
      %v159 = vmul.u32 %v155, %v157
      %v160 = vmul.u32 %v155, %v158
      %v161 = vmul.u32 %v156, %v157
      %v162 = vmul.u32 %v156, %v158
      %v163 = vshll.u32 %v160, 16
      %v164 = vshrl.u32 %v160, 16
      %v165 = vshll.u32 %v161, 16
      %v166 = vshrl.u32 %v161, 16
      %vm167 = vc.u32 %v159, %v163
      %v168 = vsel %vm167, 1, 0
      %v169 = vadd.s32 %v159, %v163
      %v170 = vadd.s32 %v162, %v168
      %vm171 = vc.u32 %v169, %v165
      %v172 = vsel %vm171, 1, 0
      %v173 = vadd.s32 %v169, %v165
      %v174 = vadd.s32 %v170, %v172
      %v175 = vadd.s32 %v174, %v164
      %v176 = vadd.s32 %v175, %v166
      %v177 = vmul.u32 %v132, %v123
      %v178 = vadd.s32 %v154, %v173
      %vm179 = vc.u32 %v154, %v173
      %v180 = vadd.s32 %v176, 1
      %v181 = vsel %vm179, %v180, %v176
      %v182 = vadd.s32 %v177, %v181
      %v183 = vadd.s32 %v182, 536870912
      %v184 = vshrl.u32 %v183, 30
      %v185 = vshll.u32 %v184, 30
      %v186 = vsub.s32 %v182, %v185
      %vm187 = vcmp.lt.s32.totalorder %v186, 0
      %v188 = vsub.s32 0, %v186
      %v189 = vsel %vm187, %v188, %v186
      %v190 = vclz %v189
      %v191 = vsub.s32 %v190, 2
      %vm192 = vcmp.gt.s32.totalorder 0, %v191
      %v193 = vsel %vm192, 0, %v191
      %v194 = vsub.s32 32, %v193
      %v195 = vshll.u32 %v186, %v193
      %v196 = vshrl.u32 %v178, %v194
      %v197 = vor.u32 %v195, %v196
      %v198 = vsub.s32 4294967266, %v193
      %v199 = vadd.s32 %v198, 127
      %v200 = vshll.u32 %v199, 23
      %v201 = vor.u32 4788187, %v200
      %v202 = vand.u32 2147483647, %v201
      %v204 = vcvt.s32.f32 %v197
      %v205 = vmul.f32 %v204, %v202
      %v206 = vxor.u32 %v205, 2147483648
      %v207 = vsel %vm86, %v206, %v205
      %v208 = vsub.s32 4, %v184
      %v209 = vsel %vm86, %v208, %v184
      %v210 = vsel %vm85, %v82, %v207
      %v211 = vsel %vm85, 0, %v209
      %v212 = vmul.f32 %v210, %v210
      %v213 = vmul.f32 %v212, -0.001358992
      %v214 = vadd.f32 %v213, 0.041655596
      %v215 = vmul.f32 %v212, %v214
      %v216 = vadd.f32 %v215, -0.4999988
      %v217 = vmul.f32 %v212, %v216
      %v218 = vadd.f32 1.0, %v217
      %v219 = vmul.f32 %v210, %v210
      %v220 = vmul.f32 %v219, -0.00019511016
      %v221 = vadd.f32 %v220, 0.008332121
      %v222 = vmul.f32 %v219, %v221
      %v223 = vadd.f32 %v222, -0.16666654
      %v224 = vmul.f32 %v219, %v223
      %v225 = vadd.f32 %v224, 1.0
      %v226 = vmul.f32 %v225, %v210
      %vm227 = vweird.f32 %v82
      %v228 = vand.u32 %v211, 3
      %vm229 = vcmp.lt.s32.totalorder %v228, 2
      %vm230 = vcmp.eq.s32.totalorder %v228, 0
      %v231 = vxor.u32 %v226, 2147483648
      %v232 = vsel %vm230, %v218, %v231
      %vm233 = vcmp.eq.s32.totalorder %v228, 2
      %v234 = vxor.u32 %v218, 2147483648
      %v235 = vsel %vm233, %v234, %v226
      %v236 = vsel %vm229, %v232, %v235
      %v237 = vsel %vm227, nan, %v236
      %v238 = vand.u32 2147483647, %v83
      %vm239 = vcmp.le.f32.partialorder %v238, 0.7853982
      %vm240 = vcmp.lt.s32.totalorder %v83, 0
      %v241 = vand.u32 %v83, 2139095040
      %v242 = vshrl.u32 %v241, 23
      %v243 = vsub.s32 %v242, 127
      %v244 = vand.u32 2147483647, %v83
      %v245 = vand.u32 %v244, 8388607
      %v246 = vor.u32 %v245, 8388608
      %v247 = vsub.s32 0, %v246
      %v248 = vadd.s32 %v243, 1
      %vm249 = vcmp.gt.s32.totalorder %v248, 0
      %v250 = vsel %vm249, %v248, 0
      %v251 = vshrl.u32 %v250, 5
      %v252 = vand.u32 %v250, 31
      %v253 = vsub.s32 32, %v252
      %v254 = vshrl.u32 683565275, %v253
      %v255 = vshll.u32 683565275, %v252
      %v256 = vshrl.u32 2475754826, %v253
      %v257 = vor.u32 %v255, %v256
      %v258 = vshll.u32 2475754826, %v252
      %v259 = vshrl.u32 2131351028, %v253
      %v260 = vor.u32 %v258, %v259
      %v261 = vshll.u32 2131351028, %v252
      %v262 = vshrl.u32 2102212464, %v253
      %v263 = vor.u32 %v261, %v262
      %v264 = vshll.u32 2102212464, %v252
      %v265 = vshrl.u32 920167782, %v253
      %v266 = vor.u32 %v264, %v265
      %v267 = vshll.u32 920167782, %v252
      %v268 = vshrl.u32 1326507024, %v253
      %v269 = vor.u32 %v267, %v268
      %vm270 = vcmp.lt.s32.totalorder %v251, 1
      %vm271 = vcmp.lt.s32.totalorder %v251, 2
      %vm272 = vcmp.lt.s32.totalorder %v251, 3
      %vm273 = vcmp.lt.s32.totalorder %v251, 4
      %v274 = vsel %vm270, %v254, %v257
      %v275 = vsel %vm273, %v263, 2102212464
      %v276 = vsel %vm272, %v260, %v275
      %v277 = vsel %vm271, %v274, %v276
      %v278 = vsel %vm270, %v257, %v260
      %v279 = vsel %vm273, %v266, 920167782
      %v280 = vsel %vm272, %v263, %v279
      %v281 = vsel %vm271, %v278, %v280
      %v282 = vsel %vm270, %v260, %v263
      %v283 = vsel %vm273, %v269, 1326507024
      %v284 = vsel %vm272, %v266, %v283
      %v285 = vsel %vm271, %v282, %v284
      %v286 = vshll.u32 %v246, 8
      %v287 = vand.u32 %v286, 65535
      %v288 = vshrl.u32 %v286, 16
      %v289 = vand.u32 %v285, 65535
      %v290 = vshrl.u32 %v285, 16
      %v291 = vmul.u32 %v287, %v289
      %v292 = vmul.u32 %v287, %v290
      %v293 = vmul.u32 %v288, %v289
      %v294 = vmul.u32 %v288, %v290
      %v295 = vshll.u32 %v292, 16
      %v296 = vshrl.u32 %v292, 16
      %v297 = vshll.u32 %v293, 16
      %v298 = vshrl.u32 %v293, 16
      %vm299 = vc.u32 %v291, %v295
      %v300 = vsel %vm299, 1, 0
      %v301 = vadd.s32 %v291, %v295
      %v302 = vadd.s32 %v294, %v300
      %vm303 = vc.u32 %v301, %v297
      %v304 = vsel %vm303, 1, 0
      %v305 = vadd.s32 %v301, %v297
      %v306 = vadd.s32 %v302, %v304
      %v307 = vadd.s32 %v306, %v296
      %v308 = vadd.s32 %v307, %v298
      %v309 = vand.u32 %v286, 65535
      %v310 = vshrl.u32 %v286, 16
      %v311 = vand.u32 %v281, 65535
      %v312 = vshrl.u32 %v281, 16
      %v313 = vmul.u32 %v309, %v311
      %v314 = vmul.u32 %v309, %v312
      %v315 = vmul.u32 %v310, %v311
      %v316 = vmul.u32 %v310, %v312
      %v317 = vshll.u32 %v314, 16
      %v318 = vshrl.u32 %v314, 16
      %v319 = vshll.u32 %v315, 16
      %v320 = vshrl.u32 %v315, 16
      %vm321 = vc.u32 %v313, %v317
      %v322 = vsel %vm321, 1, 0
      %v323 = vadd.s32 %v313, %v317
      %v324 = vadd.s32 %v316, %v322
      %vm325 = vc.u32 %v323, %v319
      %v326 = vsel %vm325, 1, 0
      %v327 = vadd.s32 %v323, %v319
      %v328 = vadd.s32 %v324, %v326
      %v329 = vadd.s32 %v328, %v318
      %v330 = vadd.s32 %v329, %v320
      %v331 = vmul.u32 %v286, %v277
      %v332 = vadd.s32 %v308, %v327
      %vm333 = vc.u32 %v308, %v327
      %v334 = vadd.s32 %v330, 1
      %v335 = vsel %vm333, %v334, %v330
      %v336 = vadd.s32 %v331, %v335
      %v337 = vadd.s32 %v336, 536870912
      %v338 = vshrl.u32 %v337, 30
      %v339 = vshll.u32 %v338, 30
      %v340 = vsub.s32 %v336, %v339
      %vm341 = vcmp.lt.s32.totalorder %v340, 0
      %v342 = vsub.s32 0, %v340
      %v343 = vsel %vm341, %v342, %v340
      %v344 = vclz %v343
      %v345 = vsub.s32 %v344, 2
      %vm346 = vcmp.gt.s32.totalorder 0, %v345
      %v347 = vsel %vm346, 0, %v345
      %v348 = vsub.s32 32, %v347
      %v349 = vshll.u32 %v340, %v347
      %v350 = vshrl.u32 %v332, %v348
      %v351 = vor.u32 %v349, %v350
      %v352 = vsub.s32 4294967266, %v347
      %v353 = vadd.s32 %v352, 127
      %v354 = vshll.u32 %v353, 23
      %v355 = vor.u32 4788187, %v354
      %v356 = vand.u32 2147483647, %v355
      %v358 = vcvt.s32.f32 %v351
      %v359 = vmul.f32 %v358, %v356
      %v360 = vxor.u32 %v359, 2147483648
      %v361 = vsel %vm240, %v360, %v359
      %v362 = vsub.s32 4, %v338
      %v363 = vsel %vm240, %v362, %v338
      %v364 = vsel %vm239, %v83, %v361
      %v365 = vsel %vm239, 0, %v363
      %v366 = vmul.f32 %v364, %v364
      %v367 = vmul.f32 %v366, -0.001358992
      %v368 = vadd.f32 %v367, 0.041655596
      %v369 = vmul.f32 %v366, %v368
      %v370 = vadd.f32 %v369, -0.4999988
      %v371 = vmul.f32 %v366, %v370
      %v372 = vadd.f32 1.0, %v371
      %v373 = vmul.f32 %v364, %v364
      %v374 = vmul.f32 %v373, -0.00019511016
      %v375 = vadd.f32 %v374, 0.008332121
      %v376 = vmul.f32 %v373, %v375
      %v377 = vadd.f32 %v376, -0.16666654
      %v378 = vmul.f32 %v373, %v377
      %v379 = vadd.f32 %v378, 1.0
      %v380 = vmul.f32 %v379, %v364
      %vm381 = vweird.f32 %v83
      %v382 = vand.u32 %v365, 3
      %vm383 = vcmp.lt.s32.totalorder %v382, 2
      %vm384 = vcmp.eq.s32.totalorder %v382, 0
      %v385 = vxor.u32 %v380, 2147483648
      %v386 = vsel %vm384, %v372, %v385
      %vm387 = vcmp.eq.s32.totalorder %v382, 2
      %v388 = vxor.u32 %v372, 2147483648
      %v389 = vsel %vm387, %v388, %v380
      %v390 = vsel %vm383, %v386, %v389
      %v391 = vsel %vm381, nan, %v390
      %v392 = vld [vmem:[#allocation3] sm:$0xff]
      %v393 = vld [vmem:[#allocation3 + $0x8] sm:$0xff]
      %v394 = vld [vmem:[#allocation3 + $0x10] sm:$0xff]
      %v395 = vld [vmem:[#allocation3 + $0x18] sm:$0xff]
      %v396 = vld [vmem:[#allocation3 + $0x20] sm:$0xff]
      %v397 = vld [vmem:[#allocation3 + $0x28] sm:$0xff]
      %v398 = vld [vmem:[#allocation3 + $0x30] sm:$0xff]
      %v399 = vld [vmem:[#allocation3 + $0x38] sm:$0xff]
      %v400 = vld [vmem:[#allocation3 + $0x40] sm:$0xff]
      %v401 = vld [vmem:[#allocation3 + $0x48] sm:$0xff]
      %v402 = vld [vmem:[#allocation3 + $0x50] sm:$0xff]
      %v403 = vld [vmem:[#allocation3 + $0x58] sm:$0xff]
      %v404 = vld [vmem:[#allocation3 + $0x60] sm:$0xff]
      %v405 = vld [vmem:[#allocation3 + $0x68] sm:$0xff]
      %v406 = vld [vmem:[#allocation3 + $0x70] sm:$0xff]
      %v407 = vld [vmem:[#allocation3 + $0x78] sm:$0xff]
      %v408 = vld [vmem:[#allocation3 + $0x80] sm:$0xff]
      %v409 = vld [vmem:[#allocation3 + $0x88] sm:$0xff]
      %v410 = vld [vmem:[#allocation3 + $0x90] sm:$0xff]
      %v411 = vld [vmem:[#allocation3 + $0x98] sm:$0xff]
      %v412 = vld [vmem:[#allocation3 + $0xa0] sm:$0xff]
      %v413 = vld [vmem:[#allocation3 + $0xa8] sm:$0xff]
      %v414 = vld [vmem:[#allocation3 + $0xb0] sm:$0xff]
      %v415 = vld [vmem:[#allocation3 + $0xb8] sm:$0xff]
      %v416 = vld [vmem:[#allocation3 + $0xc0] sm:$0xff]
      %v417 = vld [vmem:[#allocation3 + $0xc8] sm:$0xff]
      %v418 = vld [vmem:[#allocation3 + $0xd0] sm:$0xff]
      %v419 = vld [vmem:[#allocation3 + $0xd8] sm:$0xff]
      %v420 = vld [vmem:[#allocation3 + $0xe0] sm:$0xff]
      %v421 = vld [vmem:[#allocation3 + $0xe8] sm:$0xff]
      %v422 = vld [vmem:[#allocation3 + $0xf0] sm:$0xff]
      %v423 = vld [vmem:[#allocation3 + $0xf8] sm:$0xff]
      %v424 = vld [vmem:[%s4] sm:$0x1]
      %v426 = vperm.slane %v424, 0
      %428 = vmatpush.msra.mxu0 %v407
      %429 = vmatpush.msra.mxu0 %v406
      %430 = vmatpush.msra.mxu0 %v405
      %431 = vmatpush.msra.mxu0 %v404
      %432 = vmatpush.msra.mxu0 %v403
      %433 = vmatpush.msra.mxu0 %v402
      %434 = vmatpush.msra.mxu0 %v401
      %435 = vmatpush.msra.mxu0 %v400
      %436 = vmatpush.msra.mxu0 %v399
      %437 = vmatpush.msra.mxu0 %v398
      %438 = vmatpush.msra.mxu0 %v397
      %439 = vmatpush.msra.mxu0 %v396
      %440 = vmatpush.msra.mxu0 %v395
      %441 = vmatpush.msra.mxu0 %v394
      %442 = vmatpush.msra.mxu0 %v393
      %443 = vmatpush.msra.mxu0 %v392
      %444 = vmatmul.f32.gmra.mxu0 %v237
      %v445 = vpop.f32.mrf.mxu0
      %v446 = vadd.f32 %v426, %v445
      %447 = vdwg.mxu0
      %448 = vmatpush.msra.mxu0 %v423
      %449 = vmatpush.msra.mxu0 %v422
      %450 = vmatpush.msra.mxu0 %v421
      %451 = vmatpush.msra.mxu0 %v420
      %452 = vmatpush.msra.mxu0 %v419
      %453 = vmatpush.msra.mxu0 %v418
      %454 = vmatpush.msra.mxu0 %v417
      %455 = vmatpush.msra.mxu0 %v416
      %456 = vmatpush.msra.mxu0 %v415
      %457 = vmatpush.msra.mxu0 %v414
      %458 = vmatpush.msra.mxu0 %v413
      %459 = vmatpush.msra.mxu0 %v412
      %460 = vmatpush.msra.mxu0 %v411
      %461 = vmatpush.msra.mxu0 %v410
      %462 = vmatpush.msra.mxu0 %v409
      %463 = vmatpush.msra.mxu0 %v408
      %464 = vmatmul.f32.gmra.mxu0 %v391
      %v465 = vpop.f32.mrf.mxu0
      %v466 = vadd.f32 %v446, %v465
      %467 = vdwg.mxu0
      %v468 = vsub.f32 0.0, %v466
      %v469 = vmul.f32 %v468, 1.442695
      %v470 = vpow.pop %v469
      %v471 = vadd.f32 %v470, 1.0
      %v472 = vrcp.pop %v471
      %v473 = vmul.f32 %v466, %v472
      %474 = vst [vmem:[#allocation2] sm:$0xff] %v473
    $region41: #{timestep_embed.1} parent=1 // pred_fallthru
      _
    %v475 = vld [vmem:[#allocation2] sm:$0xff]
    %v476 = vld [vmem:[#allocation5] sm:$0xff]
    %v477 = vld [vmem:[#allocation5 + $0x8] sm:$0xff]
    %v478 = vld [vmem:[#allocation5 + $0x10] sm:$0xff]
    %v479 = vld [vmem:[#allocation5 + $0x18] sm:$0xff]
    %v480 = vld [vmem:[#allocation5 + $0x20] sm:$0xff]
    %v481 = vld [vmem:[#allocation5 + $0x28] sm:$0xff]
    %v482 = vld [vmem:[#allocation5 + $0x30] sm:$0xff]
    %v483 = vld [vmem:[#allocation5 + $0x38] sm:$0xff]
    %v484 = vld [vmem:[#allocation5 + $0x40] sm:$0xff]
    %v485 = vld [vmem:[#allocation5 + $0x48] sm:$0xff]
    %v486 = vld [vmem:[#allocation5 + $0x50] sm:$0xff]
    %v487 = vld [vmem:[#allocation5 + $0x58] sm:$0xff]
    %v488 = vld [vmem:[#allocation5 + $0x60] sm:$0xff]
    %v489 = vld [vmem:[#allocation5 + $0x68] sm:$0xff]
    %v490 = vld [vmem:[#allocation5 + $0x70] sm:$0xff]
    %v491 = vld [vmem:[#allocation5 + $0x78] sm:$0xff]
    %v492 = vld [vmem:[%s6] sm:$0x1]
    %v494 = vperm.slane %v492, 0
    %496 = vmatpush.msra.mxu0 %v491
    %497 = vmatpush.msra.mxu0 %v490
    %498 = vmatpush.msra.mxu0 %v489
    %499 = vmatpush.msra.mxu0 %v488
    %500 = vmatpush.msra.mxu0 %v487
    %501 = vmatpush.msra.mxu0 %v486
    %502 = vmatpush.msra.mxu0 %v485
    %503 = vmatpush.msra.mxu0 %v484
    %504 = vmatpush.msra.mxu0 %v483
    %505 = vmatpush.msra.mxu0 %v482
    %506 = vmatpush.msra.mxu0 %v481
    %507 = vmatpush.msra.mxu0 %v480
    %508 = vmatpush.msra.mxu0 %v479
    %509 = vmatpush.msra.mxu0 %v478
    %510 = vmatpush.msra.mxu0 %v477
    %511 = vmatpush.msra.mxu0 %v476
    %512 = vmatmul.f32.gmra.mxu0 %v475
    %v513 = vpop.f32.mrf.mxu0
    %v514 = vadd.f32 %v494, %v513
    %515 = vdwg.mxu0
    %516 = vst [vmem:[%s7] sm:$0xff] %v514
    // Predicated region
    $region42: #{timestep_embed.1} parent=1 // pred_check
      _
    $region43: #{timestep_embed.1} parent=1 // pred_check_branch
      %518 = sbr.rel (0) target = $region45
    $region44: #{timestep_embed.1} parent=1 // pred_region
      _
    $region45: #{timestep_embed.1} parent=1 // pred_fallthru
      _
    // Predicated region
    $region46: #{timestep_embed.1} parent=1 // pred_check
      _
    $region47: #{timestep_embed.1} parent=1 // pred_check_branch
      %520 = sbr.rel (0) target = $region49
    $region48: #{timestep_embed.1} parent=1 // pred_region
      _
    $region49: #{timestep_embed.1} parent=1 // pred_fallthru
      _
    %521 = vsyncpa [#allocation4], 1
    %522 = vsyncpa [#allocation6], 1

</llo_original>
